<compile_context>
chip_gen: v7x
topology: tpu7x:2x2x1
jax: 0.10.0
libtpu: 0.0.40
codegen_flags: <defaults>
</compile_context>

<pallas_src>
import jax
import jax.numpy as jnp
import numpy as np
from jax import lax
from jax.experimental import pallas as pl
from jax.experimental.pallas import tpu as pltpu


# Per output-row parity r, the transposed-conv taps (kernel row ky, input row
# shift dy = iy - i) contributing to output row oy = 2*i + r.  Same table is
# used for columns (kx, dx).
_TAPS_D = {0: ((1, 0), (3, -1)), 1: ((0, 1), (2, 0))}

# Below this padded channel count the fused single-dot (K = 9*Cp) form is
# used; above it, per-tap accumulating dots keep only one (Cp, HW) activation
# slab live (identical MXU pass count once Cp >= 128, far less VMEM).
_FUSED_TAP_MAX_CP = 64


def _make_kernel(H, W, Cp, nb, M, last, mm_dtype, pad):
    HW = H * W
    tap_fused = Cp <= _FUSED_TAP_MAX_CP

    def kernel(x_ref, scale_ref, shift_ref, masks_ref, a_ref, b_ref, o_ref,
               yext_ref):
        # Persistent (Cp, pad + HW + pad) scratch.  Zero the spatial margins
        # every step (cheap; also safe under megacore sharding where
        # program_id(0)==0 may never run on the second core).  The middle is
        # overwritten per image, so margins stay zero within the image loop.
        yext_ref[:, 0:pad] = jnp.zeros((Cp, pad), jnp.float32)
        yext_ref[:, pad + HW:pad + HW + pad] = jnp.zeros((Cp, pad), jnp.float32)

        scale = scale_ref[...]                  # (Cp, 1)
        shift = shift_ref[...]                  # (Cp, 1)
        masks = masks_ref[...]                  # (2, HW), {0,1}
        m_neg = masks[0:1, :]                   # valid lanes for dx = -1
        m_pos = masks[1:2, :]                   # valid lanes for dx = +1
        a = a_ref[...]                          # (M, 9*Cp), mm_dtype

        for im in range(nb):
            # Fused BatchNorm (pre-folded per-channel scale/shift) + ReLU in
            # f32 on the VPU (v5e has no bf16 VPU), at full lane width.
            y = jnp.maximum(x_ref[im] * scale + shift, 0.0)      # (Cp, HW)
            yext_ref[:, pad:pad + HW] = y                        # aligned store

            # Every (dy, dx) neighbour shift in {-1,0,1}^2 is a static lane
            # slice of the zero-margined scratch; vertical out-of-range reads
            # land in the margins, only the horizontal wrap needs the masks.
            pieces = []
            for dy in (-1, 0, 1):
                for dx in (-1, 0, 1):
                    off = pad + dy * W + dx
                    piece = yext_ref[:, off:off + HW]            # (Cp, HW)
                    if dx == -1:
                        piece = piece * m_neg
                    elif dx == 1:
                        piece = piece * m_pos
                    pieces.append(piece)

            if tap_fused:
                # Tiny Cp: one MXU matmul covers all 4 parities (+ 1x1 conv).
                bmat = jnp.concatenate(pieces, axis=0).astype(mm_dtype)
                out = jnp.dot(a, bmat, preferred_element_type=jnp.float32)
            else:
                # Production Cp: per-tap accumulating dots; avoids the
                # 9x-input (9*Cp, HW) concat slab in VMEM.
                out = jnp.dot(a[:, 0:Cp], pieces[0].astype(mm_dtype),
                              preferred_element_type=jnp.float32)
                for t in range(1, 9):
                    out = out + jnp.dot(a[:, t * Cp:(t + 1) * Cp],
                                        pieces[t].astype(mm_dtype),
                                        preferred_element_type=jnp.float32)

            if last:
                out = out + b_ref[...]                           # (8, HW) logits
                # 2-class softmax == sigmoid of the logit difference; the
                # exp(-|d|) form cannot overflow.
                d = out[0:4, :] - out[4:8, :]                    # l0 - l1
                e = jnp.exp(-jnp.abs(d))
                p0 = jnp.where(d >= 0.0, 1.0, e) / (1.0 + e)     # class 0 prob
                out = jnp.concatenate([p0, 1.0 - p0], axis=0)    # (8, HW)

            o_ref[im] = out.astype(o_ref.dtype)                  # lane-dense store

    return kernel


def _build_fused_weights(wdec, wc, bc, C, Cp, last):
    """Fold the 4 transposed-conv parities (+ optional 1x1 conv) into one matrix.

    Returns a (M, 9*Cp) weight and an (M, 1) bias with
      out[row, p] = sum_{t, ci} A[row, t*Cp + ci] * shifted_input[t][ci, p]
    where t = (dy+1)*3 + (dx+1) enumerates the 9 neighbour shifts and
      row = (r*2 + s)*C + co            (last=False, M = 4*C)
      row = k*4 + (r*2 + s)             (last=True,  M = 8, k = class index)
    """
    blocks = jnp.zeros((4, C, 9, Cp), wdec.dtype)     # (parity, co, shift, ci)
    for r in (0, 1):
        for s in (0, 1):
            par = r * 2 + s
            for ky, dy in _TAPS_D[r]:
                for kx, dx in _TAPS_D[s]:
                    t = (dy + 1) * 3 + (dx + 1)
                    # blocks[par, co, t, ci] = wdec[ci, co, ky, kx]
                    blocks = blocks.at[par, :, t, :C].set(wdec[:, :, ky, kx].T)
    if last:
        wc2 = wc[:, :, 0, 0]                                        # (2, C)
        a = jnp.einsum("kc,pcti->kpti", wc2, blocks).reshape(8, 9 * Cp)
        b = jnp.repeat(bc, 4).reshape(8, 1)
    else:
        a = blocks.reshape(4 * C, 9 * Cp)
        b = jnp.zeros((4 * C, 1), wdec.dtype)
    return a, b


def _pick_images_per_block(N, per_image_bytes,
                           target_bytes=512 * 1024,
                           max_block_bytes=4 * 1024 * 1024):
    """Images folded into one grid block: amortize the ~0.35us/step overhead
    while keeping >= 2 grid steps when possible (v7x has 2 TensorCores)."""
    if N <= 1:
        return max(N, 1)
    best = 1
    for nb in range(1, N // 2 + 1):
        if N % nb:
            continue
        if nb * per_image_bytes > max_block_bytes:
            break
        best = nb
        if nb * per_image_bytes >= target_bytes:
            break
    return best


def up_transition_forward(x_nchw, params, *, last, eps=1e-5,
                          matmul_dtype=jnp.float32):
    """Pallas implementation of up_transition.forward.

    x_nchw: (N, C, H, W) float32, PyTorch NCHW convention.
    Returns (N, C, 2H, 2W) if last=False, else (N*2H*2W, 2).
    matmul_dtype: jnp.float32 (exact) or jnp.bfloat16 (2-3x MXU throughput on
    v6e/v7x and half the activation-slab footprint; elementwise math stays f32).
    """
    N, C, H, W = x_nchw.shape
    HW = H * W
    gamma, beta = params["gamma"], params["beta"]
    wdec, wc, bc = params["wdec"], params["wc"], params["bc"]

    # BatchNorm2d in training mode (PyTorch default for a freshly built
    # module): normalize with this batch's biased statistics, then affine.
    # TODO(synk): fuse this reduction into the kernel (sum/sumsq first pass)
    # so x is read from HBM once instead of twice.
    mean = jnp.mean(x_nchw, axis=(0, 2, 3))
    var = jnp.var(x_nchw, axis=(0, 2, 3))
    scale = gamma / jnp.sqrt(var + eps)                  # (C,)
    shift = beta - mean * scale                          # (C,)

    # Pad channels up to a multiple of 8 so every sublane tile is full; padded
    # channels carry zeros and zero weight columns -> contribute nothing.
    Cp = -(-C // 8) * 8
    x3 = x_nchw.reshape(N, C, HW)
    if Cp != C:
        x3 = jnp.pad(x3, ((0, 0), (0, Cp - C), (0, 0)))
        scale = jnp.pad(scale, (0, Cp - C))
        shift = jnp.pad(shift, (0, Cp - C))
    scale2 = scale.reshape(Cp, 1)
    shift2 = shift.reshape(Cp, 1)

    # Column edge masks for the dx = -1 / dx = +1 shifts ({0,1} floats).
    col = np.arange(HW) % W
    masks = jnp.asarray(
        np.stack([(col >= 1), (col <= W - 2)]).astype(np.float32))  # (2, HW)

    a_mat, b_vec = _build_fused_weights(wdec, wc, bc, C, Cp, last)
    a_mat = a_mat.astype(matmul_dtype)
    M = a_mat.shape[0]                                   # 8 if last else 4*C

    # Lane-aligned margin width (>= W+1) so the activation store into the
    # scratch is an aligned full-lane store.
    pad = -(-(W + 1) // 128) * 128

    per_image_bytes = 4 * (Cp + M) * HW
    nb = _pick_images_per_block(N, per_image_bytes)
    grid = (N // nb,)
    block_bytes = nb * per_image_bytes
    vmem_limit = int(min(56 << 20, max(32 << 20, 4 * block_bytes + (1 << 20))))

    cost = pl.CostEstimate(
        flops=2 * N * M * 9 * Cp * HW,
        transcendentals=(N * 4 * HW) if last else 0,
        bytes_accessed=4 * (N * Cp * HW + N * M * HW + M * 9 * Cp + 2 * HW
                            + 2 * Cp + M),
    )

    kernel = _make_kernel(H, W, Cp, nb, M, last, matmul_dtype, pad)
    out_p = pl.pallas_call(
        kernel,
        out_shape=jax.ShapeDtypeStruct((N, M, HW), x_nchw.dtype),
        grid_spec=pltpu.PrefetchScalarGridSpec(
            num_scalar_prefetch=0,
            grid=grid,
            in_specs=[
                pl.BlockSpec((nb, Cp, HW), lambda n: (n, 0, 0)),
                pl.BlockSpec((Cp, 1), lambda n: (0, 0)),
                pl.BlockSpec((Cp, 1), lambda n: (0, 0)),
                pl.BlockSpec((2, HW), lambda n: (0, 0)),
                pl.BlockSpec((M, 9 * Cp), lambda n: (0, 0)),
                pl.BlockSpec((M, 1), lambda n: (0, 0)),
            ],
            out_specs=pl.BlockSpec((nb, M, HW), lambda n: (n, 0, 0)),
            scratch_shapes=[pltpu.VMEM((Cp, HW + 2 * pad), jnp.float32)],
        ),
        compiler_params=pltpu.CompilerParams(
            dimension_semantics=("parallel",),
            vmem_limit_bytes=vmem_limit),
        cost_estimate=cost,
    )(x3, scale2, shift2, masks, a_mat, b_vec)

    # Parity de-interleave back to the module's output layout.  NOTE: this is
    # one extra HBM read+write of the output (not free); a consumer that can
    # take the parity-planar (N, 2, 2, C, H, W) layout should skip it.
    if last:
        out6 = out_p.reshape(N, 2, 2, 2, H, W)           # (n, k, r, s, i, j)
        out = jnp.transpose(out6, (0, 4, 2, 5, 3, 1))    # (n, i, r, j, s, k)
        # Matches: permute(0, 2, 3, 1).contiguous().view(numel // 2, 2)
        return out.reshape(N * 2 * H * 2 * W, 2)
    out6 = out_p.reshape(N, 2, 2, C, H, W)               # (n, r, s, c, i, j)
    out = jnp.transpose(out6, (0, 3, 4, 1, 5, 2))        # (n, c, i, r, j, s)
    return out.reshape(N, C, 2 * H, 2 * W)               # NCHW


def _reference_forward(x_nchw, params, *, last, eps=1e-5):
    """Pure-JAX reference (mirrors the PyTorch forward)."""
    N, C, H, W = x_nchw.shape
    gamma, beta = params["gamma"], params["beta"]
    wdec, wc, bc = params["wdec"], params["wc"], params["bc"]

    mean = jnp.mean(x_nchw, axis=(0, 2, 3), keepdims=True)
    var = jnp.var(x_nchw, axis=(0, 2, 3), keepdims=True)
    y = (x_nchw - mean) / jnp.sqrt(var + eps)
    y = y * gamma.reshape(1, C, 1, 1) + beta.reshape(1, C, 1, 1)
    y = jnp.maximum(y, 0.0)

    # ConvTranspose2d(k=4, s=2, p=1) == conv with lhs_dilation=2, flipped
    # kernel, padding k-1-p = 2.
    w_flip = wdec[:, :, ::-1, ::-1]                 # (Cin, Cout, 4, 4)
    w_conv = jnp.transpose(w_flip, (1, 0, 2, 3))    # (Cout, Cin, 4, 4)
    out = lax.conv_general_dilated(
        y, w_conv, window_strides=(1, 1), padding=((2, 2), (2, 2)),
        lhs_dilation=(2, 2), dimension_numbers=("NCHW", "OIHW", "NCHW"))

    if last:
        logits = lax.conv_general_dilated(
            out, wc, window_strides=(1, 1), padding="VALID",
            dimension_numbers=("NCHW", "OIHW", "NCHW")) + bc.reshape(1, 2, 1, 1)
        logits = jnp.transpose(logits, (0, 2, 3, 1)).reshape(-1, 2)
        return jax.nn.softmax(logits, axis=1)
    return out


if __name__ == "__main__":
    N, C, H, W = 2, 4, 16, 16

    key = jax.random.PRNGKey(0)
    k_x, k_wdec, k_wc, k_bc = jax.random.split(key, 4)

    # Deterministic synthetic parameters (shapes match the nn.Module __init__).
    params = {
        "gamma": jnp.ones((C,), jnp.float32),                                 # bn.weight
        "beta": jnp.zeros((C,), jnp.float32),                                 # bn.bias
        "wdec": 0.1 * jax.random.normal(k_wdec, (C, C, 4, 4), jnp.float32),   # deconv.weight
        "wc": 0.1 * jax.random.normal(k_wc, (2, C, 1, 1), jnp.float32),       # conv1.weight
        "bc": 0.1 * jax.random.normal(k_bc, (2,), jnp.float32),               # conv1.bias
    }
    # TODO(synk): keep_prob is stored by the module but never used in forward().

    x = jax.random.normal(k_x, (N, C, H, W), jnp.float32)

    # last=False path: output is NCHW (N, C, 2H, 2W)
    out_mid = jax.block_until_ready(
        up_transition_forward(x, params, last=False))
    ref_mid = _reference_forward(x, params, last=False)
    assert out_mid.shape == (N, C, 2 * H, 2 * W)
    np.testing.assert_allclose(np.asarray(out_mid), np.asarray(ref_mid),
                               rtol=1e-4, atol=1e-5)

    # last=True path: output is (N*2H*2W, 2) softmax probabilities
    out_last = jax.block_until_ready(
        up_transition_forward(x, params, last=True))
    ref_last = _reference_forward(x, params, last=True)
    assert out_last.shape == (N * 2 * H * 2 * W, 2)
    np.testing.assert_allclose(np.asarray(out_last), np.asarray(ref_last),
                               rtol=1e-4, atol=1e-5)

    # bf16-matmul-operand path (v6e/v7x production option): loose tolerance.
    out_bf16 = jax.block_until_ready(
        up_transition_forward(x, params, last=False,
                              matmul_dtype=jnp.bfloat16))
    np.testing.assert_allclose(np.asarray(out_bf16), np.asarray(ref_mid),
                               rtol=5e-2, atol=5e-2)

    print("KERNEL_OK")
</pallas_src>

<mosaic_0001>
module attributes {stable_mosaic.version = 11 : i64} {
  func.func @kernel(%arg0: i32, %arg1: memref<1x8x256xf32, #tpu.memory_space<vmem>>, %arg2: memref<8x1xf32, #tpu.memory_space<vmem>>, %arg3: memref<8x1xf32, #tpu.memory_space<vmem>>, %arg4: memref<2x256xf32, #tpu.memory_space<vmem>>, %arg5: memref<16x72xf32, #tpu.memory_space<vmem>>, %arg6: memref<16x1xf32, #tpu.memory_space<vmem>>, %arg7: memref<1x16x256xf32, #tpu.memory_space<vmem>>, %arg8: memref<8x512xf32, #tpu.memory_space<vmem>>) attributes {dimension_semantics = [#tpu.dimension_semantics<parallel>], iteration_bounds = array<i64: 2>, scalar_prefetch = 0 : i64, scratch_operands = 1 : i64, tpu.core_type = #tpu.core_type<tc>, window_params = [{transform_indices = @transform_0, window_bounds = array<i64: 1, 8, 256>}, {pipeline_mode = #tpu.pipeline_mode<synchronous>, transform_indices = @transform_1, window_bounds = array<i64: 8, 1>}, {pipeline_mode = #tpu.pipeline_mode<synchronous>, transform_indices = @transform_2, window_bounds = array<i64: 8, 1>}, {pipeline_mode = #tpu.pipeline_mode<synchronous>, transform_indices = @transform_3, window_bounds = array<i64: 2, 256>}, {pipeline_mode = #tpu.pipeline_mode<synchronous>, transform_indices = @transform_4, window_bounds = array<i64: 16, 72>}, {pipeline_mode = #tpu.pipeline_mode<synchronous>, transform_indices = @transform_5, window_bounds = array<i64: 16, 1>}, {transform_indices = @transform_6, window_bounds = array<i64: 1, 16, 256>}]} {
    %cst = arith.constant 0.000000e+00 : f32
    %0 = vector.broadcast %cst : f32 to vector<8x128xf32>
    %c0 = arith.constant 0 : index
    %c0_0 = arith.constant 0 : index
    %1 = vector.load %arg8[%c0, %c0_0] : memref<8x512xf32, #tpu.memory_space<vmem>>, vector<8x128xf32>
    tpu.vector_store %arg8[%c0, %c0_0], %0 {strides = array<i32>} : memref<8x512xf32, #tpu.memory_space<vmem>>, vector<8x128xf32>,
    %cst_1 = arith.constant 0.000000e+00 : f32
    %2 = vector.broadcast %cst_1 : f32 to vector<8x128xf32>
    %c0_2 = arith.constant 0 : index
    %c384 = arith.constant 384 : index
    %3 = vector.load %arg8[%c0_2, %c384] : memref<8x512xf32, #tpu.memory_space<vmem>>, vector<8x128xf32>
    tpu.vector_store %arg8[%c0_2, %c384], %2 {strides = array<i32>} : memref<8x512xf32, #tpu.memory_space<vmem>>, vector<8x128xf32>,
    %c0_3 = arith.constant 0 : index
    %c0_4 = arith.constant 0 : index
    %4 = vector.load %arg2[%c0_3, %c0_4] : memref<8x1xf32, #tpu.memory_space<vmem>>, vector<8x1xf32>
    %c0_5 = arith.constant 0 : index
    %c0_6 = arith.constant 0 : index
    %5 = vector.load %arg3[%c0_5, %c0_6] : memref<8x1xf32, #tpu.memory_space<vmem>>, vector<8x1xf32>
    %c0_7 = arith.constant 0 : index
    %c0_8 = arith.constant 0 : index
    %6 = vector.load %arg4[%c0_7, %c0_8] : memref<2x256xf32, #tpu.memory_space<vmem>>, vector<2x256xf32>
    %7 = vector.extract_strided_slice %6 {offsets = [0, 0], sizes = [1, 256], strides = [1, 1]} : vector<2x256xf32> to vector<1x256xf32>
    %8 = vector.extract_strided_slice %6 {offsets = [1, 0], sizes = [1, 256], strides = [1, 1]} : vector<2x256xf32> to vector<1x256xf32>
    %c0_9 = arith.constant 0 : index
    %c0_10 = arith.constant 0 : index
    %9 = vector.load %arg5[%c0_9, %c0_10] : memref<16x72xf32, #tpu.memory_space<vmem>>, vector<16x72xf32>
    %c0_11 = arith.constant 0 : index
    %c0_12 = arith.constant 0 : index
    %c0_13 = arith.constant 0 : index
    %10 = vector.load %arg1[%c0_11, %c0_12, %c0_13] : memref<1x8x256xf32, #tpu.memory_space<vmem>>, vector<1x8x256xf32>
    %11 = vector.shape_cast %10 : vector<1x8x256xf32> to vector<8x256xf32>
    %12 = vector.broadcast %4 : vector<8x1xf32> to vector<8x256xf32>
    %13 = arith.mulf %11, %12 : vector<8x256xf32>
    %14 = vector.broadcast %5 : vector<8x1xf32> to vector<8x256xf32>
    %15 = arith.addf %13, %14 : vector<8x256xf32>
    %cst_14 = arith.constant 0.000000e+00 : f32
    %16 = vector.broadcast %cst_14 : f32 to vector<8x256xf32>
    %17 = arith.maximumf %15, %16 : vector<8x256xf32>
    %c0_15 = arith.constant 0 : index
    %c128 = arith.constant 128 : index
    %18 = vector.load %arg8[%c0_15, %c128] : memref<8x512xf32, #tpu.memory_space<vmem>>, vector<8x256xf32>
    tpu.vector_store %arg8[%c0_15, %c128], %17 {strides = array<i32>} : memref<8x512xf32, #tpu.memory_space<vmem>>, vector<8x256xf32>,
    %c0_16 = arith.constant 0 : index
    %c111 = arith.constant 111 : index
    %19 = vector.load %arg8[%c0_16, %c111] : memref<8x512xf32, #tpu.memory_space<vmem>>, vector<8x256xf32>
    %20 = vector.broadcast %7 : vector<1x256xf32> to vector<8x256xf32>
    %21 = arith.mulf %19, %20 : vector<8x256xf32>
    %c0_17 = arith.constant 0 : index
    %c112 = arith.constant 112 : index
    %22 = vector.load %arg8[%c0_17, %c112] : memref<8x512xf32, #tpu.memory_space<vmem>>, vector<8x256xf32>
    %c0_18 = arith.constant 0 : index
    %c113 = arith.constant 113 : index
    %23 = vector.load %arg8[%c0_18, %c113] : memref<8x512xf32, #tpu.memory_space<vmem>>, vector<8x256xf32>
    %24 = vector.broadcast %8 : vector<1x256xf32> to vector<8x256xf32>
    %25 = arith.mulf %23, %24 : vector<8x256xf32>
    %c0_19 = arith.constant 0 : index
    %c127 = arith.constant 127 : index
    %26 = vector.load %arg8[%c0_19, %c127] : memref<8x512xf32, #tpu.memory_space<vmem>>, vector<8x256xf32>
    %27 = vector.broadcast %7 : vector<1x256xf32> to vector<8x256xf32>
    %28 = arith.mulf %26, %27 : vector<8x256xf32>
    %c0_20 = arith.constant 0 : index
    %c128_21 = arith.constant 128 : index
    %29 = vector.load %arg8[%c0_20, %c128_21] : memref<8x512xf32, #tpu.memory_space<vmem>>, vector<8x256xf32>
    %c0_22 = arith.constant 0 : index
    %c129 = arith.constant 129 : index
    %30 = vector.load %arg8[%c0_22, %c129] : memref<8x512xf32, #tpu.memory_space<vmem>>, vector<8x256xf32>
    %31 = vector.broadcast %8 : vector<1x256xf32> to vector<8x256xf32>
    %32 = arith.mulf %30, %31 : vector<8x256xf32>
    %c0_23 = arith.constant 0 : index
    %c143 = arith.constant 143 : index
    %33 = vector.load %arg8[%c0_23, %c143] : memref<8x512xf32, #tpu.memory_space<vmem>>, vector<8x256xf32>
    %34 = vector.broadcast %7 : vector<1x256xf32> to vector<8x256xf32>
    %35 = arith.mulf %33, %34 : vector<8x256xf32>
    %c0_24 = arith.constant 0 : index
    %c144 = arith.constant 144 : index
    %36 = vector.load %arg8[%c0_24, %c144] : memref<8x512xf32, #tpu.memory_space<vmem>>, vector<8x256xf32>
    %c0_25 = arith.constant 0 : index
    %c145 = arith.constant 145 : index
    %37 = vector.load %arg8[%c0_25, %c145] : memref<8x512xf32, #tpu.memory_space<vmem>>, vector<8x256xf32>
    %38 = vector.broadcast %8 : vector<1x256xf32> to vector<8x256xf32>
    %39 = arith.mulf %37, %38 : vector<8x256xf32>
    %40 = tpu.concatenate %21, %22, %25, %28, %29, %32, %35, %36, %39 in 0 : vector<8x256xf32>, vector<8x256xf32>, vector<8x256xf32>, vector<8x256xf32>, vector<8x256xf32>, vector<8x256xf32>, vector<8x256xf32>, vector<8x256xf32>, vector<8x256xf32> -> vector<72x256xf32>
    %cst_26 = arith.constant dense<0.000000e+00> : vector<16x256xf32>
    %41 = tpu.matmul %9, %40, %cst_26 {dimension_numbers = #tpu.dot_dimension_numbers<[1], [0], [0], [1], [0, 0, 1, 1], [], []>} : vector<16x72xf32>, vector<72x256xf32>, vector<16x256xf32> -> vector<16x256xf32>
    %c0_27 = arith.constant 0 : index
    %c0_28 = arith.constant 0 : index
    %c0_29 = arith.constant 0 : index
    %42 = vector.load %arg7[%c0_27, %c0_28, %c0_29] : memref<1x16x256xf32, #tpu.memory_space<vmem>>, vector<1x16x256xf32>
    %43 = vector.shape_cast %42 : vector<1x16x256xf32> to vector<16x256xf32>
    %44 = vector.shape_cast %41 : vector<16x256xf32> to vector<1x16x256xf32>
    tpu.vector_store %arg7[%c0_27, %c0_28, %c0_29], %44 {strides = array<i32>} : memref<1x16x256xf32, #tpu.memory_space<vmem>>, vector<1x16x256xf32>,
    return
  }
  func.func @transform_0(%arg0: i32) -> (i32, i32, i32) {
    %c0_i32 = arith.constant 0 : i32
    %c0_i32_0 = arith.constant 0 : i32
    %c0_i32_1 = arith.constant 0 : i32
    return %arg0, %c0_i32, %c0_i32_0 : i32, i32, i32
  }
  func.func @transform_1(%arg0: i32) -> (i32, i32) {
    %c0_i32 = arith.constant 0 : i32
    %c0_i32_0 = arith.constant 0 : i32
    %c0_i32_1 = arith.constant 0 : i32
    return %c0_i32, %c0_i32_0 : i32, i32
  }
  func.func @transform_2(%arg0: i32) -> (i32, i32) {
    %c0_i32 = arith.constant 0 : i32
    %c0_i32_0 = arith.constant 0 : i32
    %c0_i32_1 = arith.constant 0 : i32
    return %c0_i32, %c0_i32_0 : i32, i32
  }
  func.func @transform_3(%arg0: i32) -> (i32, i32) {
    %c0_i32 = arith.constant 0 : i32
    %c0_i32_0 = arith.constant 0 : i32
    %c0_i32_1 = arith.constant 0 : i32
    return %c0_i32, %c0_i32_0 : i32, i32
  }
  func.func @transform_4(%arg0: i32) -> (i32, i32) {
    %c0_i32 = arith.constant 0 : i32
    %c0_i32_0 = arith.constant 0 : i32
    %c0_i32_1 = arith.constant 0 : i32
    return %c0_i32, %c0_i32_0 : i32, i32
  }
  func.func @transform_5(%arg0: i32) -> (i32, i32) {
    %c0_i32 = arith.constant 0 : i32
    %c0_i32_0 = arith.constant 0 : i32
    %c0_i32_1 = arith.constant 0 : i32
    return %c0_i32, %c0_i32_0 : i32, i32
  }
  func.func @transform_6(%arg0: i32) -> (i32, i32, i32) {
    %c0_i32 = arith.constant 0 : i32
    %c0_i32_0 = arith.constant 0 : i32
    %c0_i32_1 = arith.constant 0 : i32
    return %arg0, %c0_i32, %c0_i32_0 : i32, i32, i32
  }
}

</mosaic_0001>

<llo_original>
// kernel: tpu_custom_call.1
$region0: #{tpu_custom_call.1}
  #allocation0 [shape = 'u32[]', space=smem, size = 0x4, offset = 0x4, fixed_abs, tag = 'smem constant byte address 0x4 - core index']
  #allocation1 [shape = 'u32[144,128]{1,0:T(1,128)}', space=vmem, size = 0x12000, scoped, tag = 'internal scratch']
  #allocation2 [shape = 'f32[8,512]{1,0:T(8,128)}', space=vmem, size = 0x4000, scoped, tag = 'scratch operand']
  %s0 = inlined_call_operand.vmem [shape: f32[2,8,256], index: 0, kind: input, shape index: {}]
  %s1 = inlined_call_operand.vmem [shape: f32[8,1], index: 1, kind: input, shape index: {}]
  %s2 = inlined_call_operand.vmem [shape: f32[8,1], index: 2, kind: input, shape index: {}]
  %s3 = inlined_call_operand.hbm [shape: f32[2,256], index: 3, kind: input, shape index: {}]
  %s4 = inlined_call_operand.vmem [shape: f32[16,72], index: 4, kind: input, shape index: {}]
  %s5 = inlined_call_operand.vmem [shape: f32[16,1], index: 5, kind: input, shape index: {}]
  %s6 = inlined_call_operand.hbm [shape: f32[2,16,256], index: 6, kind: output, shape index: {}]
  %s7 = sld [smem:[#allocation0]]
  $region61: #{tpu_custom_call.1} parent=0
    _
  %s9 = ssub.s32 1, %s7
  %s10 = scalar_select 0, %s9, %s7
  $region1: #{tpu_custom_call.1} parent=0
    #allocation3 [shape = 'u8[2048]{0}', space=vmem, size = 0x800, scoped, tag = 'input window, operand 3, single buffered']
    #allocation4 [shape = 's32[2]{0}', space=sflag, size = 0x8, scoped, tag = 'scoped memory for tpu_custom_call.1']
    #allocation5 [shape = 's32[2]{0}', space=sflag, size = 0x8, scoped, tag = 'scoped memory for tpu_custom_call.1']
    #allocation6 [shape = 'u8[32768]{0}', space=vmem, size = 0x8000, scoped, tag = 'output window, operand 0']
    %11 = vsyncpa [#allocation4], 0
    %12 = vsyncpa [#allocation5], 0
    %s13 = scalar_lea.sflag [#allocation5], 1
    %14 = vsyncpa %s13, 0
    loop: start=0, step=1, limit=4
    $region2: #{tpu_custom_call.1} parent=1 // loop_pre_header
      _
    $region3: #{tpu_custom_call.1} parent=1 // loop_header
      %s16 = sphi 0, %s20
      %p17 = scmp.ge.s32.totalorder %s16, 4
      %s26 = sphi 0, %s28
      %s29 = sphi 0, %s26
      %s30 = sphi 0, %s29
      %s46 = sphi 0, %s30
      %s50 = sphi 0, %s50
      %s52 = sphi 0, %s50
      %s53 = sphi 0, %s52
      %s67 = sphi 0, %s53
      %s71 = sphi 0, %s71
      %s73 = sphi 0, %s71
      %s74 = sphi 0, %s73
      %s88 = sphi 0, %s74
      %s92 = sphi 0, %s92
      %s94 = sphi 0, %s92
      %s95 = sphi 0, %s94
      %s109 = sphi 0, %s95
      %s113 = sphi 0, %s113
      %s115 = sphi 0, %s113
      %s116 = sphi 0, %s115
      %s130 = sphi 0, %s116
      %s134 = sphi 0, %s134
      %s136 = sphi 0, %s134
      %s137 = sphi 0, %s136
      %s151 = sphi 0, %s137
      %s157 = sphi 0, %s159
      %s160 = sphi 0, %s157
      %s161 = sphi 0, %s160
      %s177 = sphi 0, %s161
    $region4: #{tpu_custom_call.1} parent=1 // loop_header_branch
      %19 = sbr.rel (%p17) target = $region8
    $region5: #{tpu_custom_call.1} parent=1 // loop_body
      %s21 = ssub.s32 %s16, 1
      %s22 = ssub.s32 %s16, 2
      %s23 = sadd.s32 %s16, 1
      %s24 = ssub.s32 %s16, %s23
      %p25 = scmp.eq.s32.totalorder %s24, 0
      %s27 = sadd.s32 %s26, 1
      %s28 = scalar_select %p25, %s26, %s27
      %p31 = pneg %p25
      %p32 = scmp.eq.s32.totalorder %s16, 1
      %p33 = por %p31, %p32
      %p34 = scmp.ne.s32.totalorder %s26, %s29
      %p35 = scmp.eq.s32.totalorder %s16, 0
      %p36 = por %p34, %p35
      %p37 = scmp.ne.s32.totalorder %s26, %s29
      %p38 = scmp.eq.s32.totalorder %s21, 1
      %p39 = por %p37, %p38
      %p40 = scmp.ne.s32.totalorder %s29, %s30
      %p41 = scmp.eq.s32.totalorder %s21, 0
      %p42 = por %p40, %p41
      %p43 = scmp.ne.s32.totalorder %s29, %s30
      %p44 = scmp.eq.s32.totalorder %s22, 1
      %p45 = por %p43, %p44
      %p47 = scmp.ne.s32.totalorder %s30, %s46
      %p48 = scmp.eq.s32.totalorder %s22, 0
      %p49 = por %p47, %p48
      %s51 = sadd.s32 %s50, 1
      %p54 = scmp.eq.s32.totalorder %s16, 1
      %p55 = scmp.ne.s32.totalorder %s50, %s52
      %p56 = scmp.eq.s32.totalorder %s16, 0
      %p57 = por %p55, %p56
      %p58 = scmp.ne.s32.totalorder %s50, %s52
      %p59 = scmp.eq.s32.totalorder %s21, 1
      %p60 = por %p58, %p59
      %p61 = scmp.ne.s32.totalorder %s52, %s53
      %p62 = scmp.eq.s32.totalorder %s21, 0
      %p63 = por %p61, %p62
      %p64 = scmp.ne.s32.totalorder %s52, %s53
      %p65 = scmp.eq.s32.totalorder %s22, 1
      %p66 = por %p64, %p65
      %p68 = scmp.ne.s32.totalorder %s53, %s67
      %p69 = scmp.eq.s32.totalorder %s22, 0
      %p70 = por %p68, %p69
      %s72 = sadd.s32 %s71, 1
      %p75 = scmp.eq.s32.totalorder %s16, 1
      %p76 = scmp.ne.s32.totalorder %s71, %s73
      %p77 = scmp.eq.s32.totalorder %s16, 0
      %p78 = por %p76, %p77
      %p79 = scmp.ne.s32.totalorder %s71, %s73
      %p80 = scmp.eq.s32.totalorder %s21, 1
      %p81 = por %p79, %p80
      %p82 = scmp.ne.s32.totalorder %s73, %s74
      %p83 = scmp.eq.s32.totalorder %s21, 0
      %p84 = por %p82, %p83
      %p85 = scmp.ne.s32.totalorder %s73, %s74
      %p86 = scmp.eq.s32.totalorder %s22, 1
      %p87 = por %p85, %p86
      %p89 = scmp.ne.s32.totalorder %s74, %s88
      %p90 = scmp.eq.s32.totalorder %s22, 0
      %p91 = por %p89, %p90
      %s93 = sadd.s32 %s92, 1
      %p96 = scmp.eq.s32.totalorder %s16, 1
      %p97 = scmp.ne.s32.totalorder %s92, %s94
      %p98 = scmp.eq.s32.totalorder %s16, 0
      %p99 = por %p97, %p98
      %p100 = scmp.ne.s32.totalorder %s92, %s94
      %p101 = scmp.eq.s32.totalorder %s21, 1
      %p102 = por %p100, %p101
      %p103 = scmp.ne.s32.totalorder %s94, %s95
      %p104 = scmp.eq.s32.totalorder %s21, 0
      %p105 = por %p103, %p104
      %p106 = scmp.ne.s32.totalorder %s94, %s95
      %p107 = scmp.eq.s32.totalorder %s22, 1
      %p108 = por %p106, %p107
      %p110 = scmp.ne.s32.totalorder %s95, %s109
      %p111 = scmp.eq.s32.totalorder %s22, 0
      %p112 = por %p110, %p111
      %s114 = sadd.s32 %s113, 1
      %p117 = scmp.eq.s32.totalorder %s16, 1
      %p118 = scmp.ne.s32.totalorder %s113, %s115
      %p119 = scmp.eq.s32.totalorder %s16, 0
      %p120 = por %p118, %p119
      %p121 = scmp.ne.s32.totalorder %s113, %s115
      %p122 = scmp.eq.s32.totalorder %s21, 1
      %p123 = por %p121, %p122
      %p124 = scmp.ne.s32.totalorder %s115, %s116
      %p125 = scmp.eq.s32.totalorder %s21, 0
      %p126 = por %p124, %p125
      %p127 = scmp.ne.s32.totalorder %s115, %s116
      %p128 = scmp.eq.s32.totalorder %s22, 1
      %p129 = por %p127, %p128
      %p131 = scmp.ne.s32.totalorder %s116, %s130
      %p132 = scmp.eq.s32.totalorder %s22, 0
      %p133 = por %p131, %p132
      %s135 = sadd.s32 %s134, 1
      %p138 = scmp.eq.s32.totalorder %s16, 1
      %p139 = scmp.ne.s32.totalorder %s134, %s136
      %p140 = scmp.eq.s32.totalorder %s16, 0
      %p141 = por %p139, %p140
      %p142 = scmp.ne.s32.totalorder %s134, %s136
      %p143 = scmp.eq.s32.totalorder %s21, 1
      %p144 = por %p142, %p143
      %p145 = scmp.ne.s32.totalorder %s136, %s137
      %p146 = scmp.eq.s32.totalorder %s21, 0
      %p147 = por %p145, %p146
      %p148 = scmp.ne.s32.totalorder %s136, %s137
      %p149 = scmp.eq.s32.totalorder %s22, 1
      %p150 = por %p148, %p149
      %p152 = scmp.ne.s32.totalorder %s137, %s151
      %p153 = scmp.eq.s32.totalorder %s22, 0
      %p154 = por %p152, %p153
      %s155 = ssub.s32 %s16, %s23
      %p156 = scmp.eq.s32.totalorder %s155, 0
      %s158 = sadd.s32 %s157, 1
      %s159 = scalar_select %p156, %s157, %s158
      %p162 = pneg %p156
      %p163 = scmp.eq.s32.totalorder %s16, 1
      %p164 = por %p162, %p163
      %p165 = scmp.ne.s32.totalorder %s157, %s160
      %p166 = scmp.eq.s32.totalorder %s16, 0
      %p167 = por %p165, %p166
      %p168 = scmp.ne.s32.totalorder %s157, %s160
      %p169 = scmp.eq.s32.totalorder %s21, 1
      %p170 = por %p168, %p169
      %p171 = scmp.ne.s32.totalorder %s160, %s161
      %p172 = scmp.eq.s32.totalorder %s21, 0
      %p173 = por %p171, %p172
      %p174 = scmp.ne.s32.totalorder %s160, %s161
      %p175 = scmp.eq.s32.totalorder %s22, 1
      %p176 = por %p174, %p175
      %p178 = scmp.ne.s32.totalorder %s161, %s177
      %p179 = scmp.eq.s32.totalorder %s22, 0
      %p180 = por %p178, %p179
      %p181 = scmp.le.s32.totalorder 1, %s16
      %p182 = scmp.lt.s32.totalorder %s16, 3
      %p183 = pnand %p181, %p182
      %p184 = pneg %p183
      // Predicated region
      $region9: #{tpu_custom_call.1} parent=5 // pred_check
        _
      $region10: #{tpu_custom_call.1} parent=5 // pred_check_branch
        %186 = sbr.rel (%p183) target = $region12
      $region11: #{tpu_custom_call.1} parent=5 // pred_region
        %s187 = ssub.s32 %s16, 1
        // Predicated region
        $region13: #{tpu_custom_call.1} parent=11 // pred_check
          %p188 = pneg %p63
        $region14: #{tpu_custom_call.1} parent=11 // pred_check_branch
          %190 = sbr.rel (%p188) target = $region16
        $region15: #{tpu_custom_call.1} parent=11 // pred_region
          _
        $region16: #{tpu_custom_call.1} parent=11 // pred_fallthru
          _
        // Predicated region
        $region17: #{tpu_custom_call.1} parent=11 // pred_check
          %p191 = pneg %p84
        $region18: #{tpu_custom_call.1} parent=11 // pred_check_branch
          %193 = sbr.rel (%p191) target = $region20
        $region19: #{tpu_custom_call.1} parent=11 // pred_region
          _
        $region20: #{tpu_custom_call.1} parent=11 // pred_fallthru
          _
        // Predicated region
        $region21: #{tpu_custom_call.1} parent=11 // pred_check
          %p194 = pneg %p105
        $region22: #{tpu_custom_call.1} parent=11 // pred_check_branch
          %196 = sbr.rel (%p194) target = $region24
        $region23: #{tpu_custom_call.1} parent=11 // pred_region
          %s198 = ssub.s32 64, 64
          %199 = vsyncadd [#allocation4], %s198
          %s201 = sshll.u32 [#allocation3], 4
          %s202 = int_to_ptr.vmem [resolvable:$true] %s201
          %204 = dma.hbm_to_vmem [thread:$0]  %s3, 64, %s202, [#allocation4]
        $region24: #{tpu_custom_call.1} parent=11 // pred_fallthru
          _
        // Predicated region
        $region25: #{tpu_custom_call.1} parent=11 // pred_check
          %p205 = pneg %p126
        $region26: #{tpu_custom_call.1} parent=11 // pred_check_branch
          %207 = sbr.rel (%p205) target = $region28
        $region27: #{tpu_custom_call.1} parent=11 // pred_region
          _
        $region28: #{tpu_custom_call.1} parent=11 // pred_fallthru
          _
        // Predicated region
        $region29: #{tpu_custom_call.1} parent=11 // pred_check
          %p208 = pneg %p147
        $region30: #{tpu_custom_call.1} parent=11 // pred_check_branch
          %210 = sbr.rel (%p208) target = $region32
        $region31: #{tpu_custom_call.1} parent=11 // pred_region
          _
        $region32: #{tpu_custom_call.1} parent=11 // pred_fallthru
          _
      $region12: #{tpu_custom_call.1} parent=5 // pred_fallthru
        _
      %p211 = scmp.lt.s32.totalorder %s16, 2
      // Predicated region
      $region33: #{tpu_custom_call.1} parent=5 // pred_check
        %p212 = pneg %p211
      $region34: #{tpu_custom_call.1} parent=5 // pred_check_branch
        %214 = sbr.rel (%p212) target = $region36
      $region35: #{tpu_custom_call.1} parent=5 // pred_region
        // Predicated region
        $region37: #{tpu_custom_call.1} parent=35 // pred_check
          %p215 = pneg %p36
        $region38: #{tpu_custom_call.1} parent=35 // pred_check_branch
          %217 = sbr.rel (%p215) target = $region40
        $region39: #{tpu_custom_call.1} parent=35 // pred_region
          %p218 = scmp.lt.s32.totalorder %s16, 1
          %s219 = scalar_select %p218, %s16, 1
          %s220 = smul.addr %s219, 2
          %s221 = smul.addr %s220, 8
          %s222 = scalar_lea.vmem %s0, %s221
        $region40: #{tpu_custom_call.1} parent=35 // pred_fallthru
          _
      $region36: #{tpu_custom_call.1} parent=5 // pred_fallthru
        _
      %p223 = scmp.le.s32.totalorder 1, %s16
      %p224 = scmp.lt.s32.totalorder %s16, 3
      %p225 = pnand %p223, %p224
      %p226 = pneg %p225
      // Predicated region
      $region41: #{tpu_custom_call.1} parent=5 // pred_check
        _
      $region42: #{tpu_custom_call.1} parent=5 // pred_check_branch
        %228 = sbr.rel (%p225) target = $region44
      $region43: #{tpu_custom_call.1} parent=5 // pred_region
        %s229 = ssub.s32 %s16, 1
        // Predicated region
        $region45: #{tpu_custom_call.1} parent=43 // pred_check
          %p230 = pneg %p105
        $region46: #{tpu_custom_call.1} parent=43 // pred_check_branch
          %232 = sbr.rel (%p230) target = $region48
        $region47: #{tpu_custom_call.1} parent=43 // pred_region
          %233 = dma.done [#allocation4], 64
        $region48: #{tpu_custom_call.1} parent=43 // pred_fallthru
          _
        %p234 = scmp.lt.s32.totalorder %s21, 1
        %s235 = scalar_select %p234, %s21, 1
        %s236 = smul.addr %s235, 2
        %s237 = smul.addr %s236, 8
        %s238 = scalar_lea.vmem %s0, %s237
        %p239 = pneg %p42
        %p240 = pneg %p39
        %p241 = pneg %p63
        %p242 = pneg %p60
        %p243 = pneg %p84
        %p244 = pneg %p81
        %p245 = pneg %p105
        %p246 = pneg %p102
        %p247 = pneg %p126
        %p248 = pneg %p123
        %p249 = pneg %p147
        %p250 = pneg %p144
        %p251 = pneg %p173
        %p252 = pneg %p170
        %s253 = sand.u32 %s160, 1
        %s254 = scalar_lea.sflag [#allocation5], %s253
        %s255 = sand.u32 %s160, 1
        %s256 = smul.addr %s255, 32
        %s257 = scalar_lea.vmem [#allocation6], %s256
        %p258 = scmp.lt.s32.totalorder %s21, 1
        %s259 = scalar_select %p258, %s21, 1
        %s260 = smul.addr %s259, 2
        %s261 = smul.addr %s260, 8
        %s262 = scalar_lea.vmem %s0, %s261
        %263 = vst [vmem:[#allocation2] sm:$0xff] 0.0
        %264 = vst [vmem:[#allocation2 + $0x18] sm:$0xff] 0.0
        %v265 = vld [vmem:[%s1] sm:$0xff]
        %v266 = vld [vmem:[%s2] sm:$0xff]
        %v267 = vld [vmem:[#allocation3] sm:$0xf]
        %v268 = vld [vmem:[%s4] sm:$0xff]
        %v269 = vld [vmem:[%s4 + $0x8] sm:$0xff]
        %v270 = vld [vmem:[%s262] sm:$0xff]
        %v271 = vld [vmem:[%s262 + $0x8] sm:$0xff]
        %273 = vset.pattern.permute.xlu0 0
        %274 = vperm.xlu0 %273, %v265
        %v275 = vpop.permute.xlu0 %274
        %v277 = vmul.f32 %v270, %v275
        %v278 = vmul.f32 %v271, %v275
        %280 = vset.pattern.permute.xlu0 0
        %281 = vperm.xlu0 %280, %v266
        %v282 = vpop.permute.xlu0 %281
        %v284 = vadd.f32 %v277, %v282
        %v285 = vadd.f32 %v278, %v282
        %v286 = vmax.f32 %v284, 0.0
        %v287 = vmax.f32 %v285, 0.0
        %288 = vst [vmem:[#allocation2 + $0x8] sm:$0xff] %v286
        %289 = vst [vmem:[#allocation2 + $0x10] sm:$0xff] %v287
        %v290 = vld [vmem:[#allocation2] sm:$0xff]
        %v291 = vld [vmem:[#allocation2 + $0x8] sm:$0xff]
        %v292 = vld [vmem:[#allocation2 + $0x10] sm:$0xff]
        %v294 = vlaneseq
        %v295 = vshrl.u32 %v294, 7
        %v296 = vsub.s32 0, %v295
        %v297 = vrot.slane %v267, %v296
        %v298 = vlaneseq
        %v299 = vshrl.u32 %v298, 7
        %v300 = vsub.s32 2, %v299
        %v301 = vrot.slane %v267, %v300
        %v304 = vlaneseq
        %v305 = vshrl.u32 %v304, 7
        %v306 = vsub.s32 0, %v305
        %v307 = vrot.slane %v297, %v306
        %v308 = vlaneseq
        %v309 = vshrl.u32 %v308, 7
        %v310 = vsub.s32 0, %v309
        %v311 = vrot.slane %v301, %v310
        %314 = vrot.lane.b32.xlu0 %v307, 111
        %v315 = vpop.permute.xlu0 %314
        %316 = vrot.lane.b32.xlu0 %v311, 111
        %v317 = vpop.permute.xlu0 %316
        %vm318 = vcmask 908288
        %v319 = vsel %vm318, %v315, %v317
        %v323 = vmul.f32 %v290, %v315
        %v324 = vmul.f32 %v291, %v319
        %v325 = vmul.f32 %v292, %v317
        %v326 = vlaneseq
        %v327 = vshrl.u32 %v326, 7
        %v328 = vsub.s32 1, %v327
        %v329 = vrot.slane %v267, %v328
        %v330 = vlaneseq
        %v331 = vshrl.u32 %v330, 7
        %v332 = vsub.s32 3, %v331
        %v333 = vrot.slane %v267, %v332
        %v336 = vlaneseq
        %v337 = vshrl.u32 %v336, 7
        %v338 = vsub.s32 1, %v337
        %v339 = vrot.slane %v329, %v338
        %v340 = vlaneseq
        %v341 = vshrl.u32 %v340, 7
        %v342 = vsub.s32 1, %v341
        %v343 = vrot.slane %v333, %v342
        %346 = vrot.lane.b32.xlu0 %v339, 113
        %v347 = vpop.permute.xlu0 %346
        %348 = vrot.lane.b32.xlu0 %v343, 113
        %v349 = vpop.permute.xlu0 %348
        %vm350 = vcmask 924672
        %v351 = vsel %vm350, %v347, %v349
        %v355 = vmul.f32 %v290, %v347
        %v356 = vmul.f32 %v291, %v351
        %v357 = vmul.f32 %v292, %v349
        %358 = vrot.lane.b32.xlu0 %v307, 127
        %v359 = vpop.permute.xlu0 %358
        %360 = vrot.lane.b32.xlu0 %v311, 127
        %v361 = vpop.permute.xlu0 %360
        %vm362 = vcmask 1039360
        %v363 = vsel %vm362, %v359, %v361
        %v367 = vmul.f32 %v290, %v359
        %v368 = vmul.f32 %v291, %v363
        %v369 = vmul.f32 %v292, %v361
        %v370 = vld [vmem:[#allocation2 + $0x8] sm:$0xff]
        %v371 = vld [vmem:[#allocation2 + $0x10] sm:$0xff]
        %v372 = vld [vmem:[#allocation2 + $0x18] sm:$0xff]
        %373 = vrot.lane.b32.xlu0 %v339, 1
        %v374 = vpop.permute.xlu0 %373
        %375 = vrot.lane.b32.xlu0 %v343, 1
        %v376 = vpop.permute.xlu0 %375
        %vm377 = vcmask 7168
        %v378 = vsel %vm377, %v374, %v376
        %v382 = vmul.f32 %v370, %v374
        %v383 = vmul.f32 %v371, %v378
        %v384 = vmul.f32 %v372, %v376
        %385 = vrot.lane.b32.xlu0 %v307, 15
        %v386 = vpop.permute.xlu0 %385
        %387 = vrot.lane.b32.xlu0 %v311, 15
        %v388 = vpop.permute.xlu0 %387
        %vm389 = vcmask 121856
        %v390 = vsel %vm389, %v386, %v388
        %v394 = vmul.f32 %v370, %v386
        %v395 = vmul.f32 %v371, %v390
        %v396 = vmul.f32 %v372, %v388
        %397 = vrot.lane.b32.xlu0 %v339, 17
        %v398 = vpop.permute.xlu0 %397
        %399 = vrot.lane.b32.xlu0 %v343, 17
        %v400 = vpop.permute.xlu0 %399
        %vm401 = vcmask 138240
        %v402 = vsel %vm401, %v398, %v400
        %v406 = vmul.f32 %v370, %v398
        %v407 = vmul.f32 %v371, %v402
        %v408 = vmul.f32 %v372, %v400
        %412 = vrot.lane.b32.xlu0 %v290, 127
        %v413 = vpop.permute.xlu0 %412
        %414 = vrot.lane.b32.xlu0 %v291, 127
        %v415 = vpop.permute.xlu0 %414
        %416 = vrot.lane.b32.xlu0 %v292, 127
        %v417 = vpop.permute.xlu0 %416
        %v418 = vsel %vm362, %v413, %v415
        %v419 = vsel %vm362, %v415, %v417
        %423 = vrot.lane.b32.xlu0 %v355, 126
        %v424 = vpop.permute.xlu0 %423
        %425 = vrot.lane.b32.xlu0 %v356, 126
        %v426 = vpop.permute.xlu0 %425
        %427 = vrot.lane.b32.xlu0 %v357, 126
        %v428 = vpop.permute.xlu0 %427
        %vm429 = vcmask 1031168
        %v430 = vsel %vm429, %v424, %v426
        %v431 = vsel %vm429, %v426, %v428
        %435 = vrot.lane.b32.xlu0 %v367, 112
        %v436 = vpop.permute.xlu0 %435
        %437 = vrot.lane.b32.xlu0 %v368, 112
        %v438 = vpop.permute.xlu0 %437
        %439 = vrot.lane.b32.xlu0 %v369, 112
        %v440 = vpop.permute.xlu0 %439
        %vm441 = vcmask 916480
        %v442 = vsel %vm441, %v436, %v438
        %v443 = vsel %vm441, %v438, %v440
        %444 = vrot.lane.b32.xlu0 %v291, 111
        %v445 = vpop.permute.xlu0 %444
        %446 = vrot.lane.b32.xlu0 %v292, 111
        %v447 = vpop.permute.xlu0 %446
        %v448 = vsel %vm318, %v445, %v447
        %452 = vrot.lane.b32.xlu0 %v382, 110
        %v453 = vpop.permute.xlu0 %452
        %454 = vrot.lane.b32.xlu0 %v383, 110
        %v455 = vpop.permute.xlu0 %454
        %456 = vrot.lane.b32.xlu0 %v384, 110
        %v457 = vpop.permute.xlu0 %456
        %vm458 = vcmask 900096
        %v459 = vsel %vm458, %v453, %v455
        %v460 = vsel %vm458, %v455, %v457
        %464 = vrot.lane.b32.xlu0 %v394, 96
        %v465 = vpop.permute.xlu0 %464
        %466 = vrot.lane.b32.xlu0 %v395, 96
        %v467 = vpop.permute.xlu0 %466
        %468 = vrot.lane.b32.xlu0 %v396, 96
        %v469 = vpop.permute.xlu0 %468
        %vm470 = vcmask 785408
        %v471 = vsel %vm470, %v465, %v467
        %v472 = vsel %vm470, %v467, %v469
        %476 = vrot.lane.b32.xlu0 %v370, 95
        %v477 = vpop.permute.xlu0 %476
        %478 = vrot.lane.b32.xlu0 %v371, 95
        %v479 = vpop.permute.xlu0 %478
        %480 = vrot.lane.b32.xlu0 %v372, 95
        %v481 = vpop.permute.xlu0 %480
        %vm482 = vcmask 777216
        %v483 = vsel %vm482, %v477, %v479
        %v484 = vsel %vm482, %v479, %v481
        %488 = vrot.lane.b32.xlu0 %v406, 94
        %v489 = vpop.permute.xlu0 %488
        %490 = vrot.lane.b32.xlu0 %v407, 94
        %v491 = vpop.permute.xlu0 %490
        %492 = vrot.lane.b32.xlu0 %v408, 94
        %v493 = vpop.permute.xlu0 %492
        %vm494 = vcmask 769024
        %v495 = vsel %vm494, %v489, %v491
        %v496 = vsel %vm494, %v491, %v493
        %500 = vrot.lane.b32.xlu0 %v323, 17
        %v501 = vpop.permute.xlu0 %500
        %502 = vrot.lane.b32.xlu0 %v324, 17
        %v503 = vpop.permute.xlu0 %502
        %504 = vrot.lane.b32.xlu0 %v325, 17
        %v505 = vpop.permute.xlu0 %504
        %506 = vrot.lane.b32.xlu0 %v418, 17
        %v507 = vpop.permute.xlu0 %506
        %508 = vrot.lane.b32.xlu0 %v419, 17
        %v509 = vpop.permute.xlu0 %508
        %510 = vrot.lane.b32.xlu0 %v417, 17
        %v511 = vpop.permute.xlu0 %510
        %512 = vrot.lane.b32.xlu0 %v430, 17
        %v513 = vpop.permute.xlu0 %512
        %514 = vrot.lane.b32.xlu0 %v431, 17
        %v515 = vpop.permute.xlu0 %514
        %516 = vrot.lane.b32.xlu0 %v428, 17
        %v517 = vpop.permute.xlu0 %516
        %518 = vrot.lane.b32.xlu0 %v442, 17
        %v519 = vpop.permute.xlu0 %518
        %520 = vrot.lane.b32.xlu0 %v443, 17
        %v521 = vpop.permute.xlu0 %520
        %522 = vrot.lane.b32.xlu0 %v440, 17
        %v523 = vpop.permute.xlu0 %522
        %524 = vrot.lane.b32.xlu0 %v445, 17
        %v525 = vpop.permute.xlu0 %524
        %526 = vrot.lane.b32.xlu0 %v448, 17
        %v527 = vpop.permute.xlu0 %526
        %528 = vrot.lane.b32.xlu0 %v447, 17
        %v529 = vpop.permute.xlu0 %528
        %530 = vrot.lane.b32.xlu0 %v453, 17
        %v531 = vpop.permute.xlu0 %530
        %532 = vrot.lane.b32.xlu0 %v459, 17
        %v533 = vpop.permute.xlu0 %532
        %534 = vrot.lane.b32.xlu0 %v460, 17
        %v535 = vpop.permute.xlu0 %534
        %536 = vrot.lane.b32.xlu0 %v465, 17
        %v537 = vpop.permute.xlu0 %536
        %538 = vrot.lane.b32.xlu0 %v471, 17
        %v539 = vpop.permute.xlu0 %538
        %540 = vrot.lane.b32.xlu0 %v472, 17
        %v541 = vpop.permute.xlu0 %540
        %542 = vrot.lane.b32.xlu0 %v477, 17
        %v543 = vpop.permute.xlu0 %542
        %544 = vrot.lane.b32.xlu0 %v483, 17
        %v545 = vpop.permute.xlu0 %544
        %546 = vrot.lane.b32.xlu0 %v484, 17
        %v547 = vpop.permute.xlu0 %546
        %548 = vrot.lane.b32.xlu0 %v489, 17
        %v549 = vpop.permute.xlu0 %548
        %550 = vrot.lane.b32.xlu0 %v495, 17
        %v551 = vpop.permute.xlu0 %550
        %552 = vrot.lane.b32.xlu0 %v496, 17
        %v553 = vpop.permute.xlu0 %552
        %v554 = vsel %vm401, %v501, %v503
        %v555 = vsel %vm401, %v503, %v505
        %v556 = vsel %vm401, %v507, %v509
        %v557 = vsel %vm401, %v509, %v511
        %v558 = vsel %vm401, %v513, %v515
        %v559 = vsel %vm401, %v515, %v517
        %v560 = vsel %vm401, %v519, %v521
        %v561 = vsel %vm401, %v521, %v523
        %v562 = vsel %vm401, %v525, %v527
        %v563 = vsel %vm401, %v527, %v529
        %v564 = vsel %vm401, %v531, %v533
        %v565 = vsel %vm401, %v533, %v535
        %v566 = vsel %vm401, %v537, %v539
        %v567 = vsel %vm401, %v539, %v541
        %v568 = vsel %vm401, %v543, %v545
        %v569 = vsel %vm401, %v545, %v547
        %v570 = vsel %vm401, %v549, %v551
        %v571 = vsel %vm401, %v551, %v553
        %vm590 = vcmask 588800
        %v592 = vsel %vm590, %v268, 0
        %v595 = vsel %vm590, %v269, 0
        %597 = vmatprep.subr.mxu0 %v555
        %598 = vmatpush1.msra.mxu0 %v554
        %599 = vmatprep.subr.mxu0 %v557
        %600 = vmatpush1.msra.mxu0 %v556
        %601 = vmatprep.subr.mxu0 %v559
        %602 = vmatpush1.msra.mxu0 %v558
        %603 = vmatprep.subr.mxu0 %v561
        %604 = vmatpush1.msra.mxu0 %v560
        %605 = vmatprep.subr.mxu0 %v563
        %606 = vmatpush1.msra.mxu0 %v562
        %607 = vmatprep.subr.mxu0 %v565
        %608 = vmatpush1.msra.mxu0 %v564
        %609 = vmatprep.subr.mxu0 %v567
        %610 = vmatpush1.msra.mxu0 %v566
        %611 = vmatprep.subr.mxu0 %v569
        %612 = vmatpush1.msra.mxu0 %v568
        %613 = vmatprep.subr.mxu0 %v571
        %614 = vmatpush1.msra.mxu0 %v570
        %615 = vmatprep.subr.mxu0 0.0
        %616 = vmatpush1.msra.mxu0 0.0
        %617 = vmatprep.subr.mxu0 0.0
        %618 = vmatpush1.msra.mxu0 0.0
        %619 = vmatprep.subr.mxu0 0.0
        %620 = vmatpush1.msra.mxu0 0.0
        %621 = vmatprep.subr.mxu0 0.0
        %622 = vmatpush1.msra.mxu0 0.0
        %623 = vmatprep.subr.mxu0 0.0
        %624 = vmatpush1.msra.mxu0 0.0
        %625 = vmatprep.subr.mxu0 0.0
        %626 = vmatpush1.msra.mxu0 0.0
        %627 = vmatprep.subr.mxu0 0.0
        %628 = vmatpush1.msra.mxu0 0.0
        %629 = vmatprep.subr.mxu0 0.0
        %630 = vmatpush1.msra.mxu0 0.0
        %631 = vmatprep.subr.mxu0 0.0
        %632 = vmatpush1.msra.mxu0 0.0
        %633 = vmatprep.subr.mxu0 0.0
        %634 = vmatpush1.msra.mxu0 0.0
        %635 = vmatprep.subr.mxu0 0.0
        %636 = vmatpush1.msra.mxu0 0.0
        %637 = vmatprep.subr.mxu0 0.0
        %638 = vmatpush1.msra.mxu0 0.0
        %639 = vmatprep.subr.mxu0 0.0
        %640 = vmatpush1.msra.mxu0 0.0
        %641 = vmatprep.subr.mxu0 0.0
        %642 = vmatpush1.msra.mxu0 0.0
        %643 = vmatprep.subr.mxu0 0.0
        %644 = vmatpush1.msra.mxu0 0.0
        %645 = vmatprep.subr.mxu0 0.0
        %646 = vmatpush1.msra.mxu0 0.0
        %647 = vmatprep.subr.mxu0 0.0
        %648 = vmatpush1.msra.mxu0 0.0
        %649 = vmatprep.subr.mxu0 0.0
        %650 = vmatpush1.msra.mxu0 0.0
        %651 = vmatprep.subr.mxu0 0.0
        %652 = vmatpush1.msra.mxu0 0.0
        %653 = vmatprep.subr.mxu0 0.0
        %654 = vmatpush1.msra.mxu0 0.0
        %655 = vmatprep.subr.mxu0 0.0
        %656 = vmatpush1.msra.mxu0 0.0
        %657 = vmatprep.subr.mxu0 0.0
        %658 = vmatpush1.msra.mxu0 0.0
        %659 = vmatprep.subr.mxu0 0.0
        %660 = vmatpush1.msra.mxu0 0.0
        %661 = vmatprep.mubr.f32.mxu0 0.0
        %662 = vmatmul.mubr.f32.gmra.mrb[0].mxu0 %v592
        %v663 = vpop.f32.mrb[0].mxu0
        %v664 = vadd.f32 0.0, %v663
        %v665 = vpop.f32.mrb[0].mxu0
        %v666 = vadd.f32 0.0, %v665
        %667 = vmatprep.mubr.f32.mxu0 0.0
        %668 = vmatmul.mubr.f32.gmra.mrb[0].mxu0 %v595
        %v669 = vpop.f32.mrb[0].mxu0
        %v670 = vadd.f32 0.0, %v669
        %v671 = vpop.f32.mrb[0].mxu0
        %v672 = vadd.f32 0.0, %v671
        %673 = vdwg.mxu0
        %674 = vst [vmem:[%s257] sm:$0xff] %v664
        %675 = vst [vmem:[%s257 + $0x8] sm:$0xff] %v666
        %676 = vst [vmem:[%s257 + $0x10] sm:$0xff] %v670
        %677 = vst [vmem:[%s257 + $0x18] sm:$0xff] %v672
        %s678 = sand.u32 %s160, 1
        %s679 = scalar_lea.sflag [#allocation5], %s678
        %s680 = sand.u32 %s160, 1
        %s681 = smul.addr %s680, 32
        %s682 = scalar_lea.vmem [#allocation6], %s681
        // Predicated region
        $region49: #{tpu_custom_call.1} parent=43 // pred_check
          %p683 = pneg %p170
        $region50: #{tpu_custom_call.1} parent=43 // pred_check_branch
          %685 = sbr.rel (%p683) target = $region52
        $region51: #{tpu_custom_call.1} parent=43 // pred_region
          %s687 = ssub.s32 512, 512
          %688 = vsyncadd %s679, %s687
          %s689 = smul.addr %s21, 4
          %s690 = smul.addr %s689, 128
          %s691 = scalar_lea.hbm %s6, %s690
          %s692 = sshll.u32 %s682, 4
          %s693 = int_to_ptr.vmem [resolvable:$true] %s692
          %698 = dma.vmem_to_hbm [thread:$0]  %s693, 512, %s691, %s679, 256, 256, 16
        $region52: #{tpu_custom_call.1} parent=43 // pred_fallthru
          _
      $region44: #{tpu_custom_call.1} parent=5 // pred_fallthru
        _
      %p699 = scmp.le.s32.totalorder 2, %s16
      // Predicated region
      $region53: #{tpu_custom_call.1} parent=5 // pred_check
        %p700 = pneg %p699
      $region54: #{tpu_custom_call.1} parent=5 // pred_check_branch
        %702 = sbr.rel (%p700) target = $region56
      $region55: #{tpu_custom_call.1} parent=5 // pred_region
        %s703 = ssub.s32 %s16, 2
        // Predicated region
        $region57: #{tpu_custom_call.1} parent=55 // pred_check
          %p704 = pneg %p176
        $region58: #{tpu_custom_call.1} parent=55 // pred_check_branch
          %706 = sbr.rel (%p704) target = $region60
        $region59: #{tpu_custom_call.1} parent=55 // pred_region
          %s707 = sand.u32 %s161, 1
          %s708 = scalar_lea.sflag [#allocation5], %s707
          %s709 = sand.u32 %s161, 1
          %s710 = smul.addr %s709, 32
          %s711 = scalar_lea.vmem [#allocation6], %s710
          %712 = dma.done %s708, 512
        $region60: #{tpu_custom_call.1} parent=55 // pred_fallthru
          _
      $region56: #{tpu_custom_call.1} parent=5 // pred_fallthru
        _
    $region6: #{tpu_custom_call.1} parent=1 // loop_footer
      %s20 = sadd.s32 1, %s16
    $region7: #{tpu_custom_call.1} parent=1 // loop_footer_branch
      %15 = sbr.rel target = $region3
    $region8: #{tpu_custom_call.1} parent=1 // loop_exit
      _
    %713 = vsyncpa [#allocation4], 1
    %s714 = scalar_lea.sflag [#allocation4], 1
    %715 = vsyncpa %s714, 1
    %716 = vsyncpa [#allocation5], 1
    %s717 = scalar_lea.sflag [#allocation5], 1
    %718 = vsyncpa %s717, 1

</llo_original>
